<compile_context>
chip_gen: v5e
topology: v5e:2x2
jax: 0.10.0
libtpu: 0.0.40
codegen_flags: <defaults>
</compile_context>

<pallas_src>
import functools
import math

import jax
import jax.numpy as jnp
from jax.experimental import pallas as pl
from jax.experimental.pallas import tpu as pltpu


# ---------------------------------------------------------------------------
# Tile-size selection (generation aware, no artificial grid minimum)
# ---------------------------------------------------------------------------

def _default_target_bytes():
    """Byte budget per LayerNorm input block.

    v6e/v7x: ~4 MiB blocks so the ~0.35us per-grid-step overhead stays <~7%
    of wall time at their HBM bandwidth.  v5e / unknown (incl. interpret):
    2 MiB, so double-buffered in + out blocks plus f32 temporaries stay well
    inside the 16 MiB scoped-VMEM default even without raising the limit.
    """
    try:
        kind = jax.devices()[0].device_kind.lower()
    except Exception:
        kind = ""
    if ("v6" in kind) or ("v7" in kind):
        return 4 << 20
    return 2 << 20


def _choose_row_tile(rows, hidden, dtype_bytes, target_bytes=None):
    del rows  # the wrapper caps the tile at the actual row count
    if target_bytes is None:
        target_bytes = _default_target_bytes()
    row_bytes = max(1, hidden * dtype_bytes)
    tile = max(8, (target_bytes // row_bytes) // 8 * 8)
    return int(tile)


# ---------------------------------------------------------------------------
# Kernel 1: LayerNorm (proj_norm)
# ---------------------------------------------------------------------------

def _layernorm_kernel(x_ref, a_ref, b_ref, o_ref, *, eps, hidden):
    x = x_ref[...]                                               # (tile, H)

    # Pass 1: mean, accumulated in f32 (no full-tile f32 copy needed here).
    mean = jnp.sum(x, axis=-1, keepdims=True, dtype=jnp.float32) * jnp.float32(
        1.0 / hidden
    )

    # Pass 2: centered values and unbiased variance (torch.std default, N-1).
    diff = x.astype(jnp.float32) - mean                          # (tile, H) f32
    var = jnp.sum(diff * diff, axis=-1, keepdims=True) * jnp.float32(
        1.0 / (hidden - 1)
    )
    std = jnp.sqrt(var)

    # Narrow (tile, 1) exact reciprocal of (std + eps), broadcast as a multiply
    # (no wide divide; exact so it matches the reference to f32 precision).
    inv = jnp.float32(1.0) / (std + jnp.float32(eps))

    a = a_ref[...].astype(jnp.float32)                           # (1, H)
    b = b_ref[...].astype(jnp.float32)                           # (1, H)
    out = a * (diff * inv) + b
    o_ref[...] = out.astype(o_ref.dtype)


def layer_norm_pallas(x, a, b, eps=1e-6, row_tile=None):
    """LayerNorm over the last axis of x with scale `a` and bias `b`."""
    orig_shape = x.shape
    hidden = orig_shape[-1]
    assert hidden >= 2, "torch unbiased std needs at least 2 elements per row"
    rows = int(math.prod(orig_shape[:-1])) if len(orig_shape) > 1 else 1

    x2 = x.reshape(rows, hidden)
    a2 = a.reshape(1, hidden)
    b2 = b.reshape(1, hidden)

    if row_tile is None:
        row_tile = _choose_row_tile(rows, hidden, jnp.dtype(x.dtype).itemsize)
    row_tile = int(row_tile)
    if row_tile >= rows:
        row_tile = rows                          # single full-extent block (always legal)
    else:
        row_tile = max(8, (row_tile // 8) * 8)   # interior blocks: sublane multiple

    grid = (pl.cdiv(rows, row_tile),)            # ragged tail handled by Pallas masking

    kernel = functools.partial(_layernorm_kernel, eps=float(eps), hidden=hidden)

    out = pl.pallas_call(
        kernel,
        out_shape=jax.ShapeDtypeStruct((rows, hidden), x.dtype),
        grid_spec=pltpu.PrefetchScalarGridSpec(
            num_scalar_prefetch=0,
            grid=grid,
            in_specs=[
                pl.BlockSpec((row_tile, hidden), lambda i: (i, 0)),
                pl.BlockSpec((1, hidden), lambda i: (0, 0)),
                pl.BlockSpec((1, hidden), lambda i: (0, 0)),
            ],
            out_specs=pl.BlockSpec((row_tile, hidden), lambda i: (i, 0)),
        ),
        compiler_params=pltpu.CompilerParams(
            dimension_semantics=("parallel",),   # row axis shards across TCs on v7x
            vmem_limit_bytes=32 << 20,           # fits 2x(in+out) 4 MiB blocks + temps
        ),
    )(x2, a2, b2)

    return out.reshape(orig_shape)


# ---------------------------------------------------------------------------
# Kernel 2: fused concat -> (Dropout eval) -> Linear(2D, 2) -> sigmoid
# ---------------------------------------------------------------------------

def _classifier_head_kernel(x1_ref, x2_ref, w1_ref, w2_ref, bias_ref, o_ref):
    # concat((x1, x2), 1) @ W^T  ==  x1 @ W1 + x2 @ W2   (concat never materialized)
    acc = jnp.dot(
        x1_ref[...].astype(jnp.float32),
        w1_ref[...].astype(jnp.float32),
        preferred_element_type=jnp.float32,
    )
    acc = acc + jnp.dot(
        x2_ref[...].astype(jnp.float32),
        w2_ref[...].astype(jnp.float32),
        preferred_element_type=jnp.float32,
    )
    acc = acc + bias_ref[...].astype(jnp.float32)
    o_ref[...] = (jnp.float32(1.0) / (jnp.float32(1.0) + jnp.exp(-acc))).astype(
        o_ref.dtype
    )


def classifier_head_pallas(out1, out2, weight, bias, row_tile=None):
    """sigmoid(concat((out1, out2), 1) @ weight.T + bias); dropout = identity (eval)."""
    B, D = out1.shape
    assert out2.shape == (B, D)
    n_out, in_features = weight.shape            # torch Linear layout: (n_out, 2*D)
    assert in_features == 2 * D

    w_t = weight.T                               # (2*D, n_out)
    w1 = w_t[:D]                                 # (D, n_out)
    w2 = w_t[D:]                                 # (D, n_out)
    bias2 = bias.reshape(1, n_out)

    if row_tile is None or int(row_tile) >= B:
        row_tile = B                             # single full-extent block
    else:
        row_tile = max(8, (int(row_tile) // 8) * 8)
    grid = (pl.cdiv(B, row_tile),)

    return pl.pallas_call(
        _classifier_head_kernel,
        out_shape=jax.ShapeDtypeStruct((B, n_out), out1.dtype),
        grid_spec=pltpu.PrefetchScalarGridSpec(
            num_scalar_prefetch=0,
            grid=grid,
            in_specs=[
                pl.BlockSpec((row_tile, D), lambda i: (i, 0)),
                pl.BlockSpec((row_tile, D), lambda i: (i, 0)),
                pl.BlockSpec((D, n_out), lambda i: (0, 0)),
                pl.BlockSpec((D, n_out), lambda i: (0, 0)),
                pl.BlockSpec((1, n_out), lambda i: (0, 0)),
            ],
            out_specs=pl.BlockSpec((row_tile, n_out), lambda i: (i, 0)),
        ),
        compiler_params=pltpu.CompilerParams(
            dimension_semantics=("parallel",),
        ),
    )(out1, out2, w1, w2, bias2)


# ---------------------------------------------------------------------------
# Pure-JAX references mirroring the PyTorch module
# ---------------------------------------------------------------------------

def layer_norm_ref(x, a, b, eps=1e-6):
    xf = x.astype(jnp.float32)
    mean = jnp.mean(xf, axis=-1, keepdims=True)
    diff = xf - mean
    var = jnp.sum(diff * diff, axis=-1, keepdims=True) / (x.shape[-1] - 1)
    std = jnp.sqrt(var)
    return (a * diff / (std + eps) + b).astype(x.dtype)


def classifier_head_ref(out1, out2, weight, bias):
    x = jnp.concatenate([out1, out2], axis=1).astype(jnp.float32)
    logits = x @ weight.T.astype(jnp.float32) + bias.astype(jnp.float32)
    return (1.0 / (1.0 + jnp.exp(-logits))).astype(out1.dtype)


# ---------------------------------------------------------------------------
# Demo / self-test
# ---------------------------------------------------------------------------

if __name__ == "__main__":
    key = jax.random.PRNGKey(0)
    k1, k2, k3, k4, k5, k6, k7, k8 = jax.random.split(key, 8)

    # --- LayerNorm (proj_norm), small shape: batch=2, seq=8, hidden=32 ---
    batch, seq, hidden = 2, 8, 32
    x = jax.random.normal(k1, (batch, seq, hidden), dtype=jnp.float32)
    a = jnp.ones((hidden,), dtype=jnp.float32)    # nn.Parameter(torch.ones(size))
    b = jnp.zeros((hidden,), dtype=jnp.float32)   # nn.Parameter(torch.zeros(size))

    out = jax.block_until_ready(layer_norm_pallas(x, a, b, eps=1e-6))
    ref = layer_norm_ref(x, a, b, eps=1e-6)
    assert out.shape == x.shape
    assert jnp.allclose(out, ref, atol=2e-5, rtol=2e-5), "LayerNorm mismatch (small)"

    # --- LayerNorm, lane-dense hidden + ragged multi-block grid (partial edge block) ---
    b2_, s2_, h2_ = 3, 37, 256                    # rows = 111, row_tile = 32 -> grid 4
    x_big = jax.random.normal(k2, (b2_, s2_, h2_), dtype=jnp.float32)
    a_big = 1.0 + 0.1 * jax.random.normal(k3, (h2_,), dtype=jnp.float32)
    b_big = 0.1 * jax.random.normal(k4, (h2_,), dtype=jnp.float32)

    out_big = jax.block_until_ready(layer_norm_pallas(x_big, a_big, b_big, row_tile=32))
    ref_big = layer_norm_ref(x_big, a_big, b_big)
    assert out_big.shape == x_big.shape
    assert jnp.allclose(out_big, ref_big, atol=2e-5, rtol=2e-5), "LayerNorm mismatch (big)"

    # --- fused concat + classifier Linear(2D, 2) + sigmoid (inference) ---
    B, Dh = 8, 32                                 # out1/out2: (batch, output_size)
    out1 = jax.random.normal(k5, (B, Dh), dtype=jnp.float32)
    out2 = jax.random.normal(k6, (B, Dh), dtype=jnp.float32)
    w = 0.1 * jax.random.normal(k7, (2, 2 * Dh), dtype=jnp.float32)
    bias = 0.1 * jax.random.normal(k8, (2,), dtype=jnp.float32)

    res = jax.block_until_ready(classifier_head_pallas(out1, out2, w, bias))
    res_ref = classifier_head_ref(out1, out2, w, bias)
    assert res.shape == (B, 2)
    assert jnp.allclose(res, res_ref, atol=2e-5, rtol=2e-5), "classifier head mismatch"

    print("KERNEL_OK")
</pallas_src>

<mosaic_0001>
module attributes {stable_mosaic.version = 11 : i64} {
  func.func @_layernorm_kernel(%arg0: i32, %arg1: memref<16x32xf32, #tpu.memory_space<vmem>>, %arg2: memref<1x32xf32, #tpu.memory_space<vmem>>, %arg3: memref<1x32xf32, #tpu.memory_space<vmem>>, %arg4: memref<16x32xf32, #tpu.memory_space<vmem>>) attributes {dimension_semantics = [#tpu.dimension_semantics<parallel>], iteration_bounds = array<i64: 1>, scalar_prefetch = 0 : i64, scratch_operands = 0 : i64, tpu.core_type = #tpu.core_type<tc>, window_params = [{transform_indices = @transform_0, window_bounds = array<i64: 16, 32>}, {pipeline_mode = #tpu.pipeline_mode<synchronous>, transform_indices = @transform_1, window_bounds = array<i64: 1, 32>}, {pipeline_mode = #tpu.pipeline_mode<synchronous>, transform_indices = @transform_2, window_bounds = array<i64: 1, 32>}, {transform_indices = @transform_3, window_bounds = array<i64: 16, 32>}]} {
    %c0 = arith.constant 0 : index
    %c0_0 = arith.constant 0 : index
    %0 = vector.load %arg1[%c0, %c0_0] : memref<16x32xf32, #tpu.memory_space<vmem>>, vector<16x32xf32>
    %cst = arith.constant dense<0.000000e+00> : vector<16xf32>
    %1 = vector.multi_reduction <add>, %0, %cst [1] : vector<16x32xf32> to vector<16xf32>
    %2 = vector.shape_cast %1 : vector<16xf32> to vector<16x1xf32>
    %cst_1 = arith.constant 3.125000e-02 : f32
    %3 = vector.broadcast %cst_1 : f32 to vector<16x1xf32>
    %4 = arith.mulf %2, %3 : vector<16x1xf32>
    %5 = vector.broadcast %4 : vector<16x1xf32> to vector<16x32xf32>
    %6 = arith.subf %0, %5 : vector<16x32xf32>
    %7 = arith.mulf %6, %6 : vector<16x32xf32>
    %cst_2 = arith.constant dense<0.000000e+00> : vector<16xf32>
    %8 = vector.multi_reduction <add>, %7, %cst_2 [1] : vector<16x32xf32> to vector<16xf32>
    %9 = vector.shape_cast %8 : vector<16xf32> to vector<16x1xf32>
    %cst_3 = arith.constant 0.0322580636 : f32
    %10 = vector.broadcast %cst_3 : f32 to vector<16x1xf32>
    %11 = arith.mulf %9, %10 : vector<16x1xf32>
    %12 = math.sqrt %11 : vector<16x1xf32>
    %cst_4 = arith.constant 9.99999997E-7 : f32
    %13 = vector.broadcast %cst_4 : f32 to vector<16x1xf32>
    %14 = arith.addf %12, %13 : vector<16x1xf32>
    %cst_5 = arith.constant 1.000000e+00 : f32
    %15 = vector.broadcast %cst_5 : f32 to vector<16x1xf32>
    %16 = arith.divf %15, %14 : vector<16x1xf32>
    %c0_6 = arith.constant 0 : index
    %c0_7 = arith.constant 0 : index
    %17 = vector.load %arg2[%c0_6, %c0_7] : memref<1x32xf32, #tpu.memory_space<vmem>>, vector<1x32xf32>
    %c0_8 = arith.constant 0 : index
    %c0_9 = arith.constant 0 : index
    %18 = vector.load %arg3[%c0_8, %c0_9] : memref<1x32xf32, #tpu.memory_space<vmem>>, vector<1x32xf32>
    %19 = vector.broadcast %16 : vector<16x1xf32> to vector<16x32xf32>
    %20 = arith.mulf %6, %19 : vector<16x32xf32>
    %21 = vector.broadcast %17 : vector<1x32xf32> to vector<16x32xf32>
    %22 = arith.mulf %21, %20 : vector<16x32xf32>
    %23 = vector.broadcast %18 : vector<1x32xf32> to vector<16x32xf32>
    %24 = arith.addf %22, %23 : vector<16x32xf32>
    %c0_10 = arith.constant 0 : index
    %c0_11 = arith.constant 0 : index
    %25 = vector.load %arg4[%c0_10, %c0_11] : memref<16x32xf32, #tpu.memory_space<vmem>>, vector<16x32xf32>
    tpu.vector_store %arg4[%c0_10, %c0_11], %24 {strides = array<i32>} : memref<16x32xf32, #tpu.memory_space<vmem>>, vector<16x32xf32>,
    return
  }
  func.func @transform_0(%arg0: i32) -> (i32, i32) {
    %c0_i32 = arith.constant 0 : i32
    %c0_i32_0 = arith.constant 0 : i32
    return %arg0, %c0_i32 : i32, i32
  }
  func.func @transform_1(%arg0: i32) -> (i32, i32) {
    %c0_i32 = arith.constant 0 : i32
    %c0_i32_0 = arith.constant 0 : i32
    %c0_i32_1 = arith.constant 0 : i32
    return %c0_i32, %c0_i32_0 : i32, i32
  }
  func.func @transform_2(%arg0: i32) -> (i32, i32) {
    %c0_i32 = arith.constant 0 : i32
    %c0_i32_0 = arith.constant 0 : i32
    %c0_i32_1 = arith.constant 0 : i32
    return %c0_i32, %c0_i32_0 : i32, i32
  }
  func.func @transform_3(%arg0: i32) -> (i32, i32) {
    %c0_i32 = arith.constant 0 : i32
    %c0_i32_0 = arith.constant 0 : i32
    return %arg0, %c0_i32 : i32, i32
  }
}

</mosaic_0001>

<llo_original>
// kernel: tpu_custom_call.1
$region0: #{tpu_custom_call.1}
  #allocation0 [shape = 'u32[]', space=smem, size = 0x4, offset = 0x4, fixed_abs, tag = 'smem constant byte address 0x4 - core index']
  #allocation1 [shape = 'u32[72,128]{1,0:T(1,128)}', space=vmem, size = 0x9000, scoped, tag = 'internal scratch']
  %s0 = inlined_call_operand.hbm [shape: f32[16,32], index: 0, kind: input, shape index: {}]
  %s1 = inlined_call_operand.hbm [shape: f32[1,32], index: 1, kind: input, shape index: {}]
  %s2 = inlined_call_operand.vmem [shape: f32[1,32], index: 2, kind: input, shape index: {}]
  %s3 = inlined_call_operand.hbm [shape: f32[16,32], index: 3, kind: output, shape index: {}]
  %s4 = sld [smem:[#allocation0]]
  $region30: #{tpu_custom_call.1} parent=0
    _
  %s6 = ssub.s32 1, %s4
  %s7 = scalar_select 0, %s6, %s4
  $region1: #{tpu_custom_call.1} parent=0
    #allocation2 [shape = 'u8[8192]{0}', space=vmem, size = 0x2000, scoped, tag = 'input window, operand 0, single buffered']
    #allocation3 [shape = 's32[1]{0}', space=sflag, size = 0x4, scoped, tag = 'scoped memory for tpu_custom_call.1']
    #allocation4 [shape = 's32[1]{0}', space=sflag, size = 0x4, scoped, tag = 'scoped memory for tpu_custom_call.1']
    #allocation5 [shape = 'u8[512]{0}', space=vmem, size = 0x400, scoped, tag = 'input window, operand 1, single buffered']
    #allocation6 [shape = 's32[1]{0}', space=sflag, size = 0x4, scoped, tag = 'scoped memory for tpu_custom_call.1']
    #allocation7 [shape = 'u8[8192]{0}', space=vmem, size = 0x2000, scoped, tag = 'output window, operand 0, single buffered']
    %8 = vsyncpa [#allocation3], 0
    %9 = vsyncpa [#allocation6], 0
    %10 = vsyncpa [#allocation4], 0
    // Predicated region
    $region2: #{tpu_custom_call.1} parent=1 // pred_check
      _
    $region3: #{tpu_custom_call.1} parent=1 // pred_check_branch
      %12 = sbr.rel (0) target = $region5
    $region4: #{tpu_custom_call.1} parent=1 // pred_region
      %14 = vsyncadd [#allocation3], 0
      %s15 = sshll.u32 %s0, 4
      %s16 = int_to_ptr.hbm [resolvable:$true] %s15
      %s17 = sshll.u32 [#allocation2], 4
      %s18 = int_to_ptr.vmem [resolvable:$true] %s17
      %23 = dma.hbm_to_vmem [thread:$0]  %s16, 256, %s18, [#allocation3], 128, 128, 8
    $region5: #{tpu_custom_call.1} parent=1 // pred_fallthru
      _
    // Predicated region
    $region6: #{tpu_custom_call.1} parent=1 // pred_check
      _
    $region7: #{tpu_custom_call.1} parent=1 // pred_check_branch
      %25 = sbr.rel (0) target = $region9
    $region8: #{tpu_custom_call.1} parent=1 // pred_region
      %27 = vsyncadd [#allocation6], 0
      %s29 = sshll.u32 %s1, 4
      %s30 = int_to_ptr.hbm [resolvable:$true] %s29
      %s31 = sshll.u32 [#allocation5], 4
      %s32 = int_to_ptr.vmem [resolvable:$true] %s31
      %34 = dma.hbm_to_vmem [thread:$0]  %s30, 16, %s32, [#allocation6]
    $region9: #{tpu_custom_call.1} parent=1 // pred_fallthru
      _
    // Predicated region
    $region10: #{tpu_custom_call.1} parent=1 // pred_check
      _
    $region11: #{tpu_custom_call.1} parent=1 // pred_check_branch
      %36 = sbr.rel (0) target = $region13
    $region12: #{tpu_custom_call.1} parent=1 // pred_region
      _
    $region13: #{tpu_custom_call.1} parent=1 // pred_fallthru
      _
    // Predicated region
    $region14: #{tpu_custom_call.1} parent=1 // pred_check
      _
    $region15: #{tpu_custom_call.1} parent=1 // pred_check_branch
      %38 = sbr.rel (0) target = $region17
    $region16: #{tpu_custom_call.1} parent=1 // pred_region
      %40 = dma.done [#allocation3], 256
    $region17: #{tpu_custom_call.1} parent=1 // pred_fallthru
      _
    // Predicated region
    $region18: #{tpu_custom_call.1} parent=1 // pred_check
      _
    $region19: #{tpu_custom_call.1} parent=1 // pred_check_branch
      %42 = sbr.rel (0) target = $region21
    $region20: #{tpu_custom_call.1} parent=1 // pred_region
      %44 = dma.done [#allocation6], 16
    $region21: #{tpu_custom_call.1} parent=1 // pred_fallthru
      _
    %v45 = vld [vmem:[#allocation2] sm:$0xff]
    %v46 = vld [vmem:[#allocation2 + $0x8] sm:$0xff]
    %vm47 = vcmask 261120
    %v48 = vsel %vm47, %v45, 0.0
    %49 = vadd.xlane.f32.xlu0 %v48
    %v50 = vpop.xlane.xlu0 %49
    %v51 = vsel %vm47, %v46, 0.0
    %52 = vadd.xlane.f32.xlu0 %v51
    %v53 = vpop.xlane.xlu0 %52
    %v54 = vmul.f32 %v50, 0.03125
    %v55 = vmul.f32 %v53, 0.03125
    %v56 = vsub.f32 %v45, %v54
    %v57 = vsub.f32 %v46, %v55
    %v58 = vmul.f32 %v56, %v56
    %v59 = vmul.f32 %v57, %v57
    %v60 = vsel %vm47, %v58, 0.0
    %61 = vadd.xlane.f32.xlu0 %v60
    %v62 = vpop.xlane.xlu0 %61
    %v63 = vsel %vm47, %v59, 0.0
    %64 = vadd.xlane.f32.xlu0 %v63
    %v65 = vpop.xlane.xlu0 %64
    %v66 = vmul.f32 %v62, 0.032258064
    %v67 = vmul.f32 %v65, 0.032258064
    %v68 = vrsqrt.pop %v66
    %v69 = vmul.f32 %v68, %v66
    %v70 = vmul.f32 %v69, %v68
    %v71 = vmul.f32 0.5, %v70
    %v72 = vsub.f32 1.5, %v71
    %v73 = vmul.f32 %v68, %v72
    %v74 = vmul.f32 %v66, %v73
    %vm75 = vcmp.eq.f32.partialorder %v66, inf
    %v76 = vsel %vm75, %v66, %v74
    %vm77 = vcmp.eq.f32.partialorder %v66, 0.0
    %v78 = vand.u32 %v66, 2147483648
    %v79 = vsel %vm77, %v78, %v76
    %v80 = vrsqrt.pop %v67
    %v81 = vmul.f32 %v80, %v67
    %v82 = vmul.f32 %v81, %v80
    %v83 = vmul.f32 0.5, %v82
    %v84 = vsub.f32 1.5, %v83
    %v85 = vmul.f32 %v80, %v84
    %v86 = vmul.f32 %v67, %v85
    %vm87 = vcmp.eq.f32.partialorder %v67, inf
    %v88 = vsel %vm87, %v67, %v86
    %vm89 = vcmp.eq.f32.partialorder %v67, 0.0
    %v90 = vand.u32 %v67, 2147483648
    %v91 = vsel %vm89, %v90, %v88
    %v92 = vadd.f32 %v79, 1e-06
    %v93 = vadd.f32 %v91, 1e-06
    %v94 = vrcp.pop %v92
    %v95 = vmul.f32 %v92, %v94
    %v96 = vsub.f32 1.0, %v95
    %v97 = vmul.f32 %v94, %v96
    %v98 = vadd.f32 %v94, %v97
    %vm99 = vweird.f32 %v92
    %vm100 = vweird.f32 %v94
    %vm101 = vmor %vm99, %vm100
    %v102 = vsel %vm101, %v94, %v98
    %v103 = vand.u32 2147483647, %v92
    %vm104 = vcmp.eq.f32.partialorder %v103, 8.507059e+37
    %v105 = vand.u32 %v92, 2147483648
    %v106 = vor.u32 1.1754944e-38, %v105
    %v107 = vsel %vm104, %v106, %v102
    %v108 = vmul.f32 1.0, %v107
    %v109 = vrcp.pop %v93
    %v110 = vmul.f32 %v93, %v109
    %v111 = vsub.f32 1.0, %v110
    %v112 = vmul.f32 %v109, %v111
    %v113 = vadd.f32 %v109, %v112
    %vm114 = vweird.f32 %v93
    %vm115 = vweird.f32 %v109
    %vm116 = vmor %vm114, %vm115
    %v117 = vsel %vm116, %v109, %v113
    %v118 = vand.u32 2147483647, %v93
    %vm119 = vcmp.eq.f32.partialorder %v118, 8.507059e+37
    %v120 = vand.u32 %v93, 2147483648
    %v121 = vor.u32 1.1754944e-38, %v120
    %v122 = vsel %vm119, %v121, %v117
    %v123 = vmul.f32 1.0, %v122
    %v124 = vld [vmem:[#allocation5] sm:$0x1]
    %v125 = vld [vmem:[%s2] sm:$0x1]
    %v126 = vmul.f32 %v56, %v108
    %v127 = vmul.f32 %v57, %v123
    %v129 = vperm.slane %v124, 0
    %v131 = vmul.f32 %v129, %v126
    %v132 = vmul.f32 %v129, %v127
    %v134 = vperm.slane %v125, 0
    %v136 = vadd.f32 %v131, %v134
    %v137 = vadd.f32 %v132, %v134
    %138 = vst.msk [vmem:[#allocation7] sm:$0xff] %vm47, %v136
    %139 = vst.msk [vmem:[#allocation7 + $0x8] sm:$0xff] %vm47, %v137
    // Predicated region
    $region22: #{tpu_custom_call.1} parent=1 // pred_check
      _
    $region23: #{tpu_custom_call.1} parent=1 // pred_check_branch
      %141 = sbr.rel (0) target = $region25
    $region24: #{tpu_custom_call.1} parent=1 // pred_region
      %143 = vsyncadd [#allocation4], 0
      %s144 = sshll.u32 [#allocation7], 4
      %s145 = int_to_ptr.vmem [resolvable:$true] %s144
      %s146 = sshll.u32 %s3, 4
      %s147 = int_to_ptr.hbm [resolvable:$true] %s146
      %152 = dma.vmem_to_hbm [thread:$0]  %s145, 256, %s147, [#allocation4], 128, 128, 8
    $region25: #{tpu_custom_call.1} parent=1 // pred_fallthru
      _
    // Predicated region
    $region26: #{tpu_custom_call.1} parent=1 // pred_check
      _
    $region27: #{tpu_custom_call.1} parent=1 // pred_check_branch
      %154 = sbr.rel (0) target = $region29
    $region28: #{tpu_custom_call.1} parent=1 // pred_region
      %156 = dma.done [#allocation4], 256
    $region29: #{tpu_custom_call.1} parent=1 // pred_fallthru
      _
    %157 = vsyncpa [#allocation3], 1
    %158 = vsyncpa [#allocation6], 1
    %159 = vsyncpa [#allocation4], 1

</llo_original>
